<compile_context>
chip_gen: v7x
topology: tpu7x:2x2x1
jax: 0.10.0
libtpu: 0.0.40
codegen_flags: <defaults>
</compile_context>

<pallas_src>
import math

import jax
import jax.numpy as jnp
from jax.experimental import pallas as pl
from jax.experimental.pallas import tpu as pltpu


# ----------------------------------------------------------------------------
# Hardware / tiling helpers
# ----------------------------------------------------------------------------
def _vmem_capacity_bytes():
    try:
        info = pltpu.get_tpu_info()
        cap = getattr(info, "vmem_capacity_bytes", None)
        if cap:
            return int(cap)
    except Exception:
        pass
    return 64 * 1024 * 1024  # conservative default (v7x per-core VMEM)


def _choose_fold(n_rows, feat):
    """Fold factor F: F consecutive rows are packed into one loaded row of
    F*feat lanes.  Prefer F with (F*feat) % 128 == 0 (lane-dense tiles) and
    F >= 8 (no sublane padding on the distance output); fall back to 1."""
    f0 = 128 // math.gcd(feat, 128)           # smallest F with F*feat % 128 == 0
    best = 1
    for cand in (f0, ((8 + f0 - 1) // f0) * f0):
        if cand >= best and n_rows % cand == 0 and cand * feat <= 8192:
            best = cand
    return best


def _budgets(vmem_cap):
    """Generation-aware (input-buffer budget, base scoped-VMEM limit)."""
    if vmem_cap >= 96 * 1024 * 1024:          # 128-MiB parts: v5e / v6e
        return 48 << 20, 64 << 20
    return 24 << 20, 40 << 20                 # 64-MiB parts: v7x


# ----------------------------------------------------------------------------
# Kernel A: streaming per-row squared distances (grid axis is fully parallel)
# ----------------------------------------------------------------------------
def _dist_kernel(sel_ref, xr_ref, xi_ref, d_ref):
    """One (tile_G, F*D) tile -> (F, tile_G) lane-dense per-row distances.

    sel[j, k] = 1.0 iff k // D == j.  The dot contracts the folded feature
    axis on the MXU (A @ B^T pattern), so d[j, g] = squared distance of
    original row g*F + j and the result is already lane-dense along g.
    """
    diff = xr_ref[...].astype(jnp.float32) - xi_ref[...].astype(jnp.float32)
    sq = diff * diff
    d_ref[...] = jax.lax.dot_general(
        sel_ref[...], sq,
        dimension_numbers=(((1,), (1,)), ((), ())),
        preferred_element_type=jnp.float32)


# ----------------------------------------------------------------------------
# Kernel B: global statistics + weighted mean over the (tiny) distance array
# ----------------------------------------------------------------------------
def _make_stats_kernel(n_rows, n_valid_cols):
    def stats_kernel(params_ref, d_ref, out_ref):
        d = d_ref[...]                                     # (F, total_cols) f32
        cols = jax.lax.broadcasted_iota(jnp.int32, d.shape, 1)
        valid = cols < n_valid_cols                        # mask padded tail
        n_f = jnp.float32(n_rows)

        # Exact two-pass statistics (stable floor() bucket boundaries).
        mean = jnp.sum(jnp.where(valid, d, 0.0)) / n_f
        centered = jnp.where(valid, d - mean, 0.0)
        # torch.std default is the unbiased estimator (divide by n-1).
        var = jnp.sum(centered * centered) / jnp.float32(n_rows - 1)
        std = jnp.sqrt(var)

        expo = jnp.floor(jnp.maximum(d - mean, 0.0) / (std + 1e-6))

        p = params_ref[0]
        log_abs_p = params_ref[1]
        # parameter ** expo as one EUP exp; expo is an integer-valued float
        # >= 0, so mirror torch.pow explicitly for p <= 0 (select-safe).
        mag = jnp.exp(expo * log_abs_p)
        odd = jnp.mod(expo, 2.0) == 1.0
        w1 = jnp.where(jnp.logical_and(p < 0.0, odd), -mag, mag)
        w1 = jnp.where(p == 0.0, jnp.where(expo == 0.0, 1.0, 0.0), w1)

        out_ref[0, 0] = jnp.sum(jnp.where(valid, d * w1, 0.0)) / n_f

    return stats_kernel


# ----------------------------------------------------------------------------
# Wrapper
# ----------------------------------------------------------------------------
def metric_loss(x_rebuild, input_x, parameter, *, tile_loaded_rows=None):
    """x_rebuild, input_x: (B, S, D); parameter: scalar. Returns f32 scalar."""
    assert x_rebuild.shape == input_x.shape and x_rebuild.ndim == 3
    b, s, feat = x_rebuild.shape
    n_rows = b * s

    F = _choose_fold(n_rows, feat)
    width = F * feat
    G = n_rows // F                           # loaded (folded) rows
    # Collapsing/folding leading dims is a contiguity-preserving reshape.
    xr = x_rebuild.reshape(G, width)
    xi = input_x.reshape(G, width)

    itemsize = jnp.dtype(x_rebuild.dtype).itemsize
    row_bytes = width * itemsize
    vmem_cap = _vmem_capacity_bytes()
    buf_budget, base_limit = _budgets(vmem_cap)

    if tile_loaded_rows is None:
        rows = buf_budget // (4 * max(row_bytes, 1))   # 2 inputs x 2 pipeline bufs
        tile_g = G if rows >= G else max(128, (rows // 128) * 128)
    else:
        tile_g = min(int(tile_loaded_rows), G)
    if tile_g < G:
        assert tile_g % 128 == 0, "row tiles must be lane-aligned (multiple of 128)"
    num_tiles = int(pl.cdiv(G, tile_g))
    total_cols = num_tiles * tile_g
    vmem_limit_a = int(min(vmem_cap,
                           max(base_limit, 4 * tile_g * row_bytes + (8 << 20))))

    # Block-diagonal selection matrix: sel[j, k] = 1 iff k // feat == j.
    sel = (jnp.arange(width, dtype=jnp.int32)[None, :] // feat
           == jnp.arange(F, dtype=jnp.int32)[:, None]).astype(jnp.float32)

    # ---- kernel A: per-row distances, spilled to HBM, parallel row tiles ----
    d = pl.pallas_call(
        _dist_kernel,
        grid=(num_tiles,),
        in_specs=[
            pl.BlockSpec((F, width), lambda i: (0, 0)),        # resident
            pl.BlockSpec((tile_g, width), lambda i: (i, 0)),
            pl.BlockSpec((tile_g, width), lambda i: (i, 0)),
        ],
        out_specs=pl.BlockSpec((F, tile_g), lambda i: (0, i)),
        out_shape=jax.ShapeDtypeStruct((F, total_cols), jnp.float32),
        compiler_params=pltpu.CompilerParams(
            # No carried state -> shard row tiles across TensorCores (v7x).
            dimension_semantics=("parallel",),
            vmem_limit_bytes=vmem_limit_a,
        ),
    )(sel, xr, xi)

    # ---- kernel B: mean / unbiased std / weights / weighted mean ------------
    p = jnp.asarray(parameter, jnp.float32)
    params = jnp.stack([p, jnp.log(jnp.abs(p))])               # (2,) f32 -> SMEM

    d_vmem = max(F, 8) * total_cols * 4
    vmem_limit_b = int(min(vmem_cap, max(32 << 20, 2 * d_vmem + (4 << 20))))
    # TODO(synk): stream the statistics in a gridded 3-phase pass when B*S is so
    # large (> ~5M rows) that the distance array no longer fits kernel B's VMEM.
    out = pl.pallas_call(
        _make_stats_kernel(n_rows, G),
        grid=(1,),
        in_specs=[
            pl.BlockSpec(memory_space=pltpu.MemorySpace.SMEM),
            pl.BlockSpec((F, total_cols), lambda i: (0, 0)),
        ],
        out_specs=pl.BlockSpec((1, 1), lambda i: (0, 0)),
        out_shape=jax.ShapeDtypeStruct((1, 1), jnp.float32),
        compiler_params=pltpu.CompilerParams(
            dimension_semantics=("arbitrary",),
            vmem_limit_bytes=vmem_limit_b,
        ),
    )(params, d)
    return out[0, 0]


# ----------------------------------------------------------------------------
# Pure-JAX reference mirroring the PyTorch module
# ----------------------------------------------------------------------------
def _metric_loss_ref(x_rebuild, input_x, parameter):
    d = jnp.sum((x_rebuild.astype(jnp.float32) - input_x.astype(jnp.float32)) ** 2,
                axis=2)
    mean = jnp.mean(d)
    std = jnp.std(d, ddof=1)          # torch.std is unbiased by default
    expo = jnp.floor(jnp.maximum(d - mean, 0.0) / (std + 1e-6))
    w1 = jnp.power(jnp.float32(parameter), expo)
    return jnp.mean(d * w1)


if __name__ == "__main__":
    key = jax.random.PRNGKey(0)
    k1, k2, k3, k4, k5, k6 = jax.random.split(key, 6)
    parameter = 2.0  # deterministic scalar hyperparameter

    # Case 1: module-spec shape (single tile, lane-dense folded path, F=8).
    B, S, D = 2, 8, 32
    xr1 = jax.random.normal(k1, (B, S, D), dtype=jnp.float32)
    xi1 = jax.random.normal(k2, (B, S, D), dtype=jnp.float32)
    out1 = jax.block_until_ready(metric_loss(xr1, xi1, parameter))
    ref1 = _metric_loss_ref(xr1, xi1, parameter)
    assert jnp.allclose(out1, ref1, rtol=1e-5, atol=1e-5), (out1, ref1)

    # Case 2: multi-tile streaming path with a ragged (masked) tail.
    xr2 = jax.random.normal(k3, (6, 200, 32), dtype=jnp.float32)
    xi2 = jax.random.normal(k4, (6, 200, 32), dtype=jnp.float32)
    out2 = jax.block_until_ready(metric_loss(xr2, xi2, parameter, tile_loaded_rows=128))
    ref2 = _metric_loss_ref(xr2, xi2, parameter)
    assert jnp.allclose(out2, ref2, rtol=1e-5, atol=1e-5), (out2, ref2)

    # Case 3: row count not divisible by the fold factor (F=1 fallback path).
    xr3 = jax.random.normal(k5, (3, 5, 32), dtype=jnp.float32)
    xi3 = jax.random.normal(k6, (3, 5, 32), dtype=jnp.float32)
    out3 = jax.block_until_ready(metric_loss(xr3, xi3, parameter))
    ref3 = _metric_loss_ref(xr3, xi3, parameter)
    assert jnp.allclose(out3, ref3, rtol=1e-5, atol=1e-5), (out3, ref3)

    print("KERNEL_OK")
</pallas_src>

<mosaic_0001>
module attributes {stable_mosaic.version = 11 : i64} {
  func.func @_dist_kernel(%arg0: i32, %arg1: memref<8x256xf32, #tpu.memory_space<vmem>>, %arg2: memref<2x256xf32, #tpu.memory_space<vmem>>, %arg3: memref<2x256xf32, #tpu.memory_space<vmem>>, %arg4: memref<8x2xf32, #tpu.memory_space<vmem>>) attributes {dimension_semantics = [#tpu.dimension_semantics<parallel>], iteration_bounds = array<i64: 1>, scalar_prefetch = 0 : i64, scratch_operands = 0 : i64, tpu.core_type = #tpu.core_type<tc>, window_params = [{pipeline_mode = #tpu.pipeline_mode<synchronous>, transform_indices = @transform_0, window_bounds = array<i64: 8, 256>}, {transform_indices = @transform_1, window_bounds = array<i64: 2, 256>}, {transform_indices = @transform_2, window_bounds = array<i64: 2, 256>}, {transform_indices = @transform_3, window_bounds = array<i64: 8, 2>}]} {
    %c0 = arith.constant 0 : index
    %c0_0 = arith.constant 0 : index
    %0 = vector.load %arg2[%c0, %c0_0] : memref<2x256xf32, #tpu.memory_space<vmem>>, vector<2x256xf32>
    %c0_1 = arith.constant 0 : index
    %c0_2 = arith.constant 0 : index
    %1 = vector.load %arg3[%c0_1, %c0_2] : memref<2x256xf32, #tpu.memory_space<vmem>>, vector<2x256xf32>
    %2 = arith.subf %0, %1 : vector<2x256xf32>
    %3 = arith.mulf %2, %2 : vector<2x256xf32>
    %c0_3 = arith.constant 0 : index
    %c0_4 = arith.constant 0 : index
    %4 = vector.load %arg1[%c0_3, %c0_4] : memref<8x256xf32, #tpu.memory_space<vmem>>, vector<8x256xf32>
    %cst = arith.constant dense<0.000000e+00> : vector<8x2xf32>
    %5 = tpu.matmul %4, %3, %cst {dimension_numbers = #tpu.dot_dimension_numbers<[1], [1], [0], [0], [0, 0, 1, 0], [], []>} : vector<8x256xf32>, vector<2x256xf32>, vector<8x2xf32> -> vector<8x2xf32>
    %c0_5 = arith.constant 0 : index
    %c0_6 = arith.constant 0 : index
    %6 = vector.load %arg4[%c0_5, %c0_6] : memref<8x2xf32, #tpu.memory_space<vmem>>, vector<8x2xf32>
    tpu.vector_store %arg4[%c0_5, %c0_6], %5 {strides = array<i32>} : memref<8x2xf32, #tpu.memory_space<vmem>>, vector<8x2xf32>,
    return
  }
  func.func @transform_0(%arg0: i32) -> (i32, i32) {
    %c0_i32 = arith.constant 0 : i32
    %c0_i32_0 = arith.constant 0 : i32
    %c0_i32_1 = arith.constant 0 : i32
    return %c0_i32, %c0_i32_0 : i32, i32
  }
  func.func @transform_1(%arg0: i32) -> (i32, i32) {
    %c0_i32 = arith.constant 0 : i32
    %c0_i32_0 = arith.constant 0 : i32
    return %arg0, %c0_i32 : i32, i32
  }
  func.func @transform_2(%arg0: i32) -> (i32, i32) {
    %c0_i32 = arith.constant 0 : i32
    %c0_i32_0 = arith.constant 0 : i32
    return %arg0, %c0_i32 : i32, i32
  }
  func.func @transform_3(%arg0: i32) -> (i32, i32) {
    %c0_i32 = arith.constant 0 : i32
    %c0_i32_0 = arith.constant 0 : i32
    return %c0_i32, %arg0 : i32, i32
  }
}

</mosaic_0001>

<llo_original>
// kernel: tpu_custom_call.1
$region0: #{tpu_custom_call.1}
  #allocation0 [shape = 'u32[]', space=smem, size = 0x4, offset = 0x4, fixed_abs, tag = 'smem constant byte address 0x4 - core index']
  #allocation1 [shape = 'u32[144,128]{1,0:T(1,128)}', space=vmem, size = 0x12000, scoped, tag = 'internal scratch']
  %s0 = inlined_call_operand.hbm [shape: f32[8,256], index: 0, kind: input, shape index: {}]
  %s1 = inlined_call_operand.hbm [shape: f32[2,256], index: 1, kind: input, shape index: {}]
  %s2 = inlined_call_operand.vmem [shape: f32[2,256], index: 2, kind: input, shape index: {}]
  %s3 = inlined_call_operand.vmem [shape: f32[8,2], index: 3, kind: output, shape index: {}]
  %s4 = sld [smem:[#allocation0]]
  $region30: #{tpu_custom_call.1} parent=0
    _
  %s6 = ssub.s32 1, %s4
  %s7 = scalar_select 0, %s6, %s4
  $region1: #{tpu_custom_call.1} parent=0
    #allocation2 [shape = 'u8[8192]{0}', space=vmem, size = 0x2000, scoped, tag = 'input window, operand 0, single buffered']
    #allocation3 [shape = 's32[1]{0}', space=sflag, size = 0x4, scoped, tag = 'scoped memory for tpu_custom_call.1']
    #allocation4 [shape = 'u8[2048]{0}', space=vmem, size = 0x800, scoped, tag = 'input window, operand 1, single buffered']
    #allocation5 [shape = 's32[1]{0}', space=sflag, size = 0x4, scoped, tag = 'scoped memory for tpu_custom_call.1']
    %8 = vsyncpa [#allocation3], 0
    %9 = vsyncpa [#allocation5], 0
    // Predicated region
    $region2: #{tpu_custom_call.1} parent=1 // pred_check
      _
    $region3: #{tpu_custom_call.1} parent=1 // pred_check_branch
      %11 = sbr.rel (0) target = $region5
    $region4: #{tpu_custom_call.1} parent=1 // pred_region
      %s13 = ssub.s32 256, 256
      %14 = vsyncadd [#allocation3], %s13
      %s16 = sshll.u32 [#allocation2], 4
      %s17 = int_to_ptr.vmem [resolvable:$true] %s16
      %19 = dma.hbm_to_vmem [thread:$0]  %s0, 256, %s17, [#allocation3]
    $region5: #{tpu_custom_call.1} parent=1 // pred_fallthru
      _
    // Predicated region
    $region6: #{tpu_custom_call.1} parent=1 // pred_check
      _
    $region7: #{tpu_custom_call.1} parent=1 // pred_check_branch
      %21 = sbr.rel (0) target = $region9
    $region8: #{tpu_custom_call.1} parent=1 // pred_region
      %s23 = ssub.s32 64, 64
      %24 = vsyncadd [#allocation5], %s23
      %s26 = sshll.u32 [#allocation4], 4
      %s27 = int_to_ptr.vmem [resolvable:$true] %s26
      %29 = dma.hbm_to_vmem [thread:$0]  %s1, 64, %s27, [#allocation5]
    $region9: #{tpu_custom_call.1} parent=1 // pred_fallthru
      _
    // Predicated region
    $region10: #{tpu_custom_call.1} parent=1 // pred_check
      _
    $region11: #{tpu_custom_call.1} parent=1 // pred_check_branch
      %31 = sbr.rel (0) target = $region13
    $region12: #{tpu_custom_call.1} parent=1 // pred_region
      _
    $region13: #{tpu_custom_call.1} parent=1 // pred_fallthru
      _
    // Predicated region
    $region14: #{tpu_custom_call.1} parent=1 // pred_check
      _
    $region15: #{tpu_custom_call.1} parent=1 // pred_check_branch
      %33 = sbr.rel (0) target = $region17
    $region16: #{tpu_custom_call.1} parent=1 // pred_region
      %34 = dma.done [#allocation3], 256
    $region17: #{tpu_custom_call.1} parent=1 // pred_fallthru
      _
    // Predicated region
    $region18: #{tpu_custom_call.1} parent=1 // pred_check
      _
    $region19: #{tpu_custom_call.1} parent=1 // pred_check_branch
      %36 = sbr.rel (0) target = $region21
    $region20: #{tpu_custom_call.1} parent=1 // pred_region
      %37 = dma.done [#allocation5], 64
    $region21: #{tpu_custom_call.1} parent=1 // pred_fallthru
      _
    %v38 = vld [vmem:[#allocation4] sm:$0xf]
    %v39 = vld [vmem:[%s2] sm:$0xf]
    %v40 = vsub.f32 %v38, %v39
    %v41 = vmul.f32 %v40, %v40
    %v42 = vld [vmem:[#allocation2] sm:$0xff]
    %v43 = vld [vmem:[#allocation2 + $0x8] sm:$0xff]
    %v46 = vunpack.c.l.s4 1983009808
    %v47 = vunpack.c.0.s8 %v46
    %v48 = vlaneseq
    %v49 = vshrl.u32 %v48, 7
    %v50 = vsub.s32 %v47, %v49
    %v51 = vrot.slane %v41, %v50
    %v52 = vcombine.high %v51, %v51
    %55 = vmatprep.subr.mxu0 %v52
    %56 = vmatpush1.xpose.msra.mxu0 %v51
    %57 = vmatprep.subr.mxu0 0.0
    %58 = vmatpush1.xpose.msra.mxu0 0.0
    %59 = vmatprep.subr.mxu0 0.0
    %60 = vmatpush1.xpose.msra.mxu0 0.0
    %61 = vmatprep.subr.mxu0 0.0
    %62 = vmatpush1.xpose.msra.mxu0 0.0
    %63 = vmatprep.subr.mxu0 0.0
    %64 = vmatpush1.xpose.msra.mxu0 0.0
    %65 = vmatprep.subr.mxu0 0.0
    %66 = vmatpush1.xpose.msra.mxu0 0.0
    %67 = vmatprep.subr.mxu0 0.0
    %68 = vmatpush1.xpose.msra.mxu0 0.0
    %69 = vmatprep.subr.mxu0 0.0
    %70 = vmatpush1.xpose.msra.mxu0 0.0
    %71 = vmatprep.subr.mxu0 0.0
    %72 = vmatpush1.xpose.msra.mxu0 0.0
    %73 = vmatprep.subr.mxu0 0.0
    %74 = vmatpush1.xpose.msra.mxu0 0.0
    %75 = vmatprep.subr.mxu0 0.0
    %76 = vmatpush1.xpose.msra.mxu0 0.0
    %77 = vmatprep.subr.mxu0 0.0
    %78 = vmatpush1.xpose.msra.mxu0 0.0
    %79 = vmatprep.subr.mxu0 0.0
    %80 = vmatpush1.xpose.msra.mxu0 0.0
    %81 = vmatprep.subr.mxu0 0.0
    %82 = vmatpush1.xpose.msra.mxu0 0.0
    %83 = vmatprep.subr.mxu0 0.0
    %84 = vmatpush1.xpose.msra.mxu0 0.0
    %85 = vmatprep.subr.mxu0 0.0
    %86 = vmatpush1.xpose.msra.mxu0 0.0
    %87 = vmatprep.subr.mxu0 0.0
    %88 = vmatpush1.xpose.msra.mxu0 0.0
    %89 = vmatprep.subr.mxu0 0.0
    %90 = vmatpush1.xpose.msra.mxu0 0.0
    %91 = vmatprep.subr.mxu0 0.0
    %92 = vmatpush1.xpose.msra.mxu0 0.0
    %93 = vmatprep.subr.mxu0 0.0
    %94 = vmatpush1.xpose.msra.mxu0 0.0
    %95 = vmatprep.subr.mxu0 0.0
    %96 = vmatpush1.xpose.msra.mxu0 0.0
    %97 = vmatprep.subr.mxu0 0.0
    %98 = vmatpush1.xpose.msra.mxu0 0.0
    %99 = vmatprep.subr.mxu0 0.0
    %100 = vmatpush1.xpose.msra.mxu0 0.0
    %101 = vmatprep.subr.mxu0 0.0
    %102 = vmatpush1.xpose.msra.mxu0 0.0
    %103 = vmatprep.subr.mxu0 0.0
    %104 = vmatpush1.xpose.msra.mxu0 0.0
    %105 = vmatprep.subr.mxu0 0.0
    %106 = vmatpush1.xpose.msra.mxu0 0.0
    %107 = vmatprep.subr.mxu0 0.0
    %108 = vmatpush1.xpose.msra.mxu0 0.0
    %109 = vmatprep.subr.mxu0 0.0
    %110 = vmatpush1.xpose.msra.mxu0 0.0
    %111 = vmatprep.subr.mxu0 0.0
    %112 = vmatpush1.xpose.msra.mxu0 0.0
    %113 = vmatprep.subr.mxu0 0.0
    %114 = vmatpush1.xpose.msra.mxu0 0.0
    %115 = vmatprep.subr.mxu0 0.0
    %116 = vmatpush1.xpose.msra.mxu0 0.0
    %117 = vmatprep.subr.mxu0 0.0
    %118 = vmatpush1.xpose.msra.mxu0 0.0
    %119 = vmatprep.mubr.f32.mxu0 %v43
    %120 = vmatmul.mubr.f32.gmra.mrb[0].mxu0 %v42
    %v121 = vpop.f32.mrb[0].mxu0
    %v122 = vadd.f32 0.0, %v121
    %v123 = vpop.f32.mrb[0].mxu0
    %124 = vdwg.mxu0
    %vm125 = vcmask 15360
    %126 = vst.msk [vmem:[%s3] sm:$0xff] %vm125, %v122
    // Predicated region
    $region22: #{tpu_custom_call.1} parent=1 // pred_check
      _
    $region23: #{tpu_custom_call.1} parent=1 // pred_check_branch
      %128 = sbr.rel (0) target = $region25
    $region24: #{tpu_custom_call.1} parent=1 // pred_region
      _
    $region25: #{tpu_custom_call.1} parent=1 // pred_fallthru
      _
    // Predicated region
    $region26: #{tpu_custom_call.1} parent=1 // pred_check
      _
    $region27: #{tpu_custom_call.1} parent=1 // pred_check_branch
      %130 = sbr.rel (0) target = $region29
    $region28: #{tpu_custom_call.1} parent=1 // pred_region
      _
    $region29: #{tpu_custom_call.1} parent=1 // pred_fallthru
      _
    %131 = vsyncpa [#allocation3], 1
    %132 = vsyncpa [#allocation5], 1

</llo_original>
